<compile_context>
chip_gen: v7x
topology: tpu7x:2x2x1
jax: 0.10.0
libtpu: 0.0.40
codegen_flags: <defaults>
</compile_context>

<pallas_src>
import jax
import jax.numpy as jnp
from jax import lax
from jax.experimental import pallas as pl
from jax.experimental.pallas import tpu as pltpu

_LANE = 128
_SUBLANE = 8
_TK_GRANULE = 256                       # preferred K-tile granule on v6e/v7x
_TARGET_WENC_BLOCK_BYTES = 4 << 20      # ~4 MiB streamed wenc block per grid step
_MAX_STREAM_BYTES = 24 << 20            # double-buffered streams stay v7x-safe


def _round_up(x, m):
    return ((x + m - 1) // m) * m


def _choose_tk(K, Ep):
    """Pick the contraction tile so each streamed wenc block is ~4 MiB
    (amortizes the fixed per-grid-step overhead) while the double-buffered
    streamed operands stay well inside v7x's 64 MiB physical VMEM."""
    tk = max(_TK_GRANULE,
             (_TARGET_WENC_BLOCK_BYTES // (Ep * 2)) // _TK_GRANULE * _TK_GRANULE)
    tk = min(tk, _round_up(K, _TK_GRANULE))

    def stream_bytes(t):                # wenc bf16 + x f32, double-buffered
        return 2 * t * Ep * 2 + 2 * 64 * t * 4   # assumes Bp <= 64

    while tk > _TK_GRANULE and stream_bytes(tk) > _MAX_STREAM_BYTES:
        tk -= _TK_GRANULE
    return tk


def _biovil_kernel(x_ref, wenc_ref, benc_ref, w1_ref, b1_ref, w2_ref, b2_ref,
                   o_ref, acc_ref):
    k = pl.program_id(0)

    # ---- init accumulator on first K step ----
    @pl.when(k == 0)
    def _():
        acc_ref[...] = jnp.zeros_like(acc_ref)

    # ---- stand-in encoder: streamed K-tile of (flatten + linear) ----
    # x tile is tiny; cast to bf16 in-kernel -> single bf16xbf16 MXU pass.
    acc_ref[...] += jnp.dot(x_ref[...].astype(jnp.bfloat16), wenc_ref[...],
                            preferred_element_type=jnp.float32)

    # ---- epilogue only after the full contraction is accumulated ----
    @pl.when(k == pl.num_programs(0) - 1)
    def _():
        emb = acc_ref[...] + benc_ref[...]

        # torch.nn.functional.normalize(x, dim=1), eps=1e-12:
        #   x / max(||x||_2, eps)  ==  x * rsqrt(max(sum(x^2), eps^2))
        sumsq = jnp.sum(emb * emb, axis=1, keepdims=True)
        emb = emb * lax.rsqrt(jnp.maximum(sumsq, 1e-24))

        # ClassificationHead: fc1 -> ReLU -> dropout(identity, eval) -> fc2
        h = jnp.dot(emb, w1_ref[...],
                    preferred_element_type=jnp.float32) + b1_ref[...]
        h = jnp.maximum(h, 0.0)
        out = jnp.dot(h, w2_ref[...],
                      preferred_element_type=jnp.float32) + b2_ref[...]
        o_ref[...] = out.astype(o_ref.dtype)


def pack_params(params, image_shape, *, tk=None):
    """One-time pad/cast of the weights into their TPU layouts.

    Hoisted out of the per-call hot path: the previous per-call bf16 repack of
    wenc read/wrote ~3x the kernel's own HBM traffic on the dominant operand.
    """
    C, H, W = image_shape
    K = C * H * W
    wenc, benc, w1, b1, w2, b2 = (params["wenc"], params["benc"], params["w1"],
                                  params["b1"], params["w2"], params["b2"])
    assert wenc.shape[0] == K
    E, H1, NC = wenc.shape[1], w1.shape[1], w2.shape[1]

    Ep = _round_up(E, _LANE)
    H1p = _round_up(H1, _LANE)
    NCp = _round_up(NC, _LANE)

    if tk is None:
        TK = _choose_tk(K, Ep)
    else:
        # guard: user-supplied tile must respect the (8,128) tiling rules
        TK = min(max(_LANE, _round_up(tk, _LANE)), _round_up(K, _LANE))
    Kp = _round_up(K, TK)

    # streamed weight in bf16 (halves HBM bytes on the dominant operand);
    # zero padding is exact (padded rows/cols contribute nothing).
    wencp = jnp.zeros((Kp, Ep), jnp.bfloat16).at[:K, :E].set(
        wenc.astype(jnp.bfloat16))
    bencp = jnp.zeros((1, Ep), jnp.float32).at[:, :E].set(benc.astype(jnp.float32))
    w1p = jnp.zeros((Ep, H1p), jnp.float32).at[:E, :H1].set(w1.astype(jnp.float32))
    b1p = jnp.zeros((1, H1p), jnp.float32).at[:, :H1].set(b1.astype(jnp.float32))
    w2p = jnp.zeros((H1p, NCp), jnp.float32).at[:H1, :NC].set(w2.astype(jnp.float32))
    b2p = jnp.zeros((1, NCp), jnp.float32).at[:, :NC].set(b2.astype(jnp.float32))

    return dict(wencp=wencp, bencp=bencp, w1p=w1p, b1p=b1p, w2p=w2p, b2p=b2p,
                K=K, E=E, H1=H1, NC=NC, Kp=Kp, TK=TK, Ep=Ep, H1p=H1p, NCp=NCp)


def biovil_forward(x_nchw, packed):
    """x_nchw: [B, C, H, W] float32. packed: output of pack_params().
    Returns logits [B, num_classes] float32."""
    B, C, H, W = x_nchw.shape
    K, Kp, TK = packed["K"], packed["Kp"], packed["TK"]
    Ep, H1p, NCp, NC = packed["Ep"], packed["H1p"], packed["NCp"], packed["NC"]
    assert C * H * W == K

    # matches torch.flatten(x, 1): row-major [B, C*H*W]; x stays f32 (tiny
    # fraction of the streamed bytes, avoids a per-call cast).
    x_flat = x_nchw.reshape(B, K).astype(jnp.float32)
    Bp = _round_up(max(B, _SUBLANE), _SUBLANE)
    if (Bp, Kp) != (B, K):
        xp = jnp.zeros((Bp, Kp), jnp.float32).at[:B, :K].set(x_flat)
    else:
        xp = x_flat

    grid_k = Kp // TK

    # VMEM budget derived from the actual block sizes (+margin); the TK cap in
    # pack_params keeps this comfortably under v7x's 64 MiB physical VMEM.
    stream_bytes = 2 * TK * Ep * 2 + 2 * Bp * TK * 4        # wenc + x, dbl-buf
    resident_bytes = 2 * 4 * (Ep + Ep * H1p + H1p + H1p * NCp + NCp)
    scratch_out_bytes = Bp * Ep * 4 + 2 * Bp * NCp * 4
    vmem_limit = min(max(stream_bytes + resident_bytes + scratch_out_bytes
                         + (8 << 20), 16 << 20), 48 << 20)

    cost = pl.CostEstimate(
        flops=2 * Bp * Kp * Ep + 2 * Bp * Ep * H1p + 2 * Bp * H1p * NCp,
        transcendentals=Bp,
        bytes_accessed=(xp.size * 4 + packed["wencp"].size * 2 +
                        (packed["bencp"].size + packed["w1p"].size +
                         packed["b1p"].size + packed["w2p"].size +
                         packed["b2p"].size) * 4 + Bp * NCp * 4),
    )

    out_padded = pl.pallas_call(
        _biovil_kernel,
        out_shape=jax.ShapeDtypeStruct((Bp, NCp), jnp.float32),
        grid_spec=pltpu.PrefetchScalarGridSpec(
            num_scalar_prefetch=0,
            grid=(grid_k,),
            in_specs=[
                pl.BlockSpec((Bp, TK), lambda k: (0, k)),     # x: stream K tiles
                pl.BlockSpec((TK, Ep), lambda k: (k, 0)),     # wenc: stream K tiles
                pl.BlockSpec((1, Ep), lambda k: (0, 0)),      # benc: resident
                pl.BlockSpec((Ep, H1p), lambda k: (0, 0)),    # w1: resident
                pl.BlockSpec((1, H1p), lambda k: (0, 0)),     # b1: resident
                pl.BlockSpec((H1p, NCp), lambda k: (0, 0)),   # w2: resident
                pl.BlockSpec((1, NCp), lambda k: (0, 0)),     # b2: resident
            ],
            out_specs=pl.BlockSpec((Bp, NCp), lambda k: (0, 0)),
            scratch_shapes=[pltpu.VMEM((Bp, Ep), jnp.float32)],
        ),
        compiler_params=pltpu.CompilerParams(
            dimension_semantics=("arbitrary",),   # K is a reduction axis
            vmem_limit_bytes=int(vmem_limit),
        ),
        cost_estimate=cost,
    )(xp, packed["wencp"], packed["bencp"], packed["w1p"], packed["b1p"],
      packed["w2p"], packed["b2p"])

    return out_padded[:B, :NC]


def init_params(key, in_features, embedding_size, hidden_1, num_classes):
    k = jax.random.split(key, 6)
    # deterministic small-scale init (synthetic; no checkpoint loading)
    wenc = jax.random.normal(k[0], (in_features, embedding_size), jnp.float32) * 0.02
    benc = jax.random.normal(k[1], (1, embedding_size), jnp.float32) * 0.02
    w1 = jax.random.normal(k[2], (embedding_size, hidden_1), jnp.float32) * 0.1
    b1 = jax.random.normal(k[3], (1, hidden_1), jnp.float32) * 0.1
    w2 = jax.random.normal(k[4], (hidden_1, num_classes), jnp.float32) * 0.1
    b2 = jax.random.normal(k[5], (1, num_classes), jnp.float32) * 0.1
    return dict(wenc=wenc, benc=benc, w1=w1, b1=b1, w2=w2, b2=b2)


def _reference_forward(x_nchw, params):
    """Pure-JAX reference with the same bf16 quantization of wenc."""
    B = x_nchw.shape[0]
    x = x_nchw.reshape(B, -1).astype(jnp.bfloat16).astype(jnp.float32)
    wenc = params["wenc"].astype(jnp.bfloat16).astype(jnp.float32)
    emb = x @ wenc + params["benc"]
    norm = jnp.maximum(jnp.sqrt(jnp.sum(emb * emb, axis=1, keepdims=True)), 1e-12)
    emb = emb / norm
    h = jnp.maximum(emb @ params["w1"] + params["b1"], 0.0)
    return h @ params["w2"] + params["b2"]


if __name__ == "__main__":
    # small shapes consistent with the module
    B, C, H, W = 2, 4, 16, 16
    embedding_size, hidden_1, num_classes = 32, 32, 4

    key = jax.random.PRNGKey(0)
    kx, kp = jax.random.split(key)
    x = jax.random.normal(kx, (B, C, H, W), jnp.float32)

    params = init_params(kp, C * H * W, embedding_size, hidden_1, num_classes)

    # one-time weight packing (hoisted out of the per-call hot path)
    packed = pack_params(params, (C, H, W))

    logits = biovil_forward(x, packed)
    jax.block_until_ready(logits)

    assert logits.shape == (B, num_classes)
    assert logits.dtype == jnp.float32
    assert bool(jnp.all(jnp.isfinite(logits)))

    ref = _reference_forward(x, params)
    assert bool(jnp.allclose(logits, ref, rtol=5e-2, atol=5e-2))

    print("KERNEL_OK")
</pallas_src>

<mosaic_0001>
module attributes {stable_mosaic.version = 11 : i64} {
  func.func @_biovil_kernel(%arg0: i32, %arg1: memref<8x1024xf32, #tpu.memory_space<vmem>>, %arg2: memref<1024x128xbf16, #tpu.memory_space<vmem>>, %arg3: memref<1x128xf32, #tpu.memory_space<vmem>>, %arg4: memref<128x128xf32, #tpu.memory_space<vmem>>, %arg5: memref<1x128xf32, #tpu.memory_space<vmem>>, %arg6: memref<128x128xf32, #tpu.memory_space<vmem>>, %arg7: memref<1x128xf32, #tpu.memory_space<vmem>>, %arg8: memref<8x128xf32, #tpu.memory_space<vmem>>, %arg9: memref<8x128xf32, #tpu.memory_space<vmem>>) attributes {dimension_semantics = [#tpu.dimension_semantics<arbitrary>], iteration_bounds = array<i64: 1>, scalar_prefetch = 0 : i64, scratch_operands = 1 : i64, tpu.core_type = #tpu.core_type<tc>, window_params = [{transform_indices = @transform_0, window_bounds = array<i64: 8, 1024>}, {transform_indices = @transform_1, window_bounds = array<i64: 1024, 128>}, {pipeline_mode = #tpu.pipeline_mode<synchronous>, transform_indices = @transform_2, window_bounds = array<i64: 1, 128>}, {pipeline_mode = #tpu.pipeline_mode<synchronous>, transform_indices = @transform_3, window_bounds = array<i64: 128, 128>}, {pipeline_mode = #tpu.pipeline_mode<synchronous>, transform_indices = @transform_4, window_bounds = array<i64: 1, 128>}, {pipeline_mode = #tpu.pipeline_mode<synchronous>, transform_indices = @transform_5, window_bounds = array<i64: 128, 128>}, {pipeline_mode = #tpu.pipeline_mode<synchronous>, transform_indices = @transform_6, window_bounds = array<i64: 1, 128>}, {pipeline_mode = #tpu.pipeline_mode<synchronous>, transform_indices = @transform_7, window_bounds = array<i64: 8, 128>}]} {
    %c0_i32 = arith.constant 0 : i32
    %0 = arith.cmpi eq, %arg0, %c0_i32 : i32
    %1 = arith.extui %0 : i1 to i32
    %c0_i32_0 = arith.constant 0 : i32
    %2 = arith.cmpi ne, %1, %c0_i32_0 : i32
    scf.if %2 {
      %cst_10 = arith.constant 0.000000e+00 : f32
      %13 = vector.broadcast %cst_10 : f32 to vector<8x128xf32>
      %c0_11 = arith.constant 0 : index
      %c0_12 = arith.constant 0 : index
      %14 = vector.load %arg9[%c0_11, %c0_12] : memref<8x128xf32, #tpu.memory_space<vmem>>, vector<8x128xf32>
      tpu.vector_store %arg9[%c0_11, %c0_12], %13 {strides = array<i32>} : memref<8x128xf32, #tpu.memory_space<vmem>>, vector<8x128xf32>,
    } else {
    }
    %c0 = arith.constant 0 : index
    %c0_1 = arith.constant 0 : index
    %3 = vector.load %arg9[%c0, %c0_1] : memref<8x128xf32, #tpu.memory_space<vmem>>, vector<8x128xf32>
    %c0_2 = arith.constant 0 : index
    %c0_3 = arith.constant 0 : index
    %4 = vector.load %arg1[%c0_2, %c0_3] : memref<8x1024xf32, #tpu.memory_space<vmem>>, vector<8x1024xf32>
    %5 = arith.truncf %4 : vector<8x1024xf32> to vector<8x1024xbf16>
    %c0_4 = arith.constant 0 : index
    %c0_5 = arith.constant 0 : index
    %6 = vector.load %arg2[%c0_4, %c0_5] : memref<1024x128xbf16, #tpu.memory_space<vmem>>, vector<1024x128xbf16>
    %cst = arith.constant dense<0.000000e+00> : vector<8x128xf32>
    %7 = tpu.matmul %5, %6, %cst {dimension_numbers = #tpu.dot_dimension_numbers<[1], [0], [0], [1], [0, 0, 1, 1], [], []>} : vector<8x1024xbf16>, vector<1024x128xbf16>, vector<8x128xf32> -> vector<8x128xf32>
    %8 = arith.addf %3, %7 : vector<8x128xf32>
    %c0_6 = arith.constant 0 : index
    %c0_7 = arith.constant 0 : index
    %9 = vector.load %arg9[%c0_6, %c0_7] : memref<8x128xf32, #tpu.memory_space<vmem>>, vector<8x128xf32>
    tpu.vector_store %arg9[%c0_6, %c0_7], %8 {strides = array<i32>} : memref<8x128xf32, #tpu.memory_space<vmem>>, vector<8x128xf32>,
    %c0_i32_8 = arith.constant 0 : i32
    %10 = arith.cmpi eq, %arg0, %c0_i32_8 : i32
    %11 = arith.extui %10 : i1 to i32
    %c0_i32_9 = arith.constant 0 : i32
    %12 = arith.cmpi ne, %11, %c0_i32_9 : i32
    scf.if %12 {
      %c0_10 = arith.constant 0 : index
      %c0_11 = arith.constant 0 : index
      %13 = vector.load %arg9[%c0_10, %c0_11] : memref<8x128xf32, #tpu.memory_space<vmem>>, vector<8x128xf32>
      %c0_12 = arith.constant 0 : index
      %c0_13 = arith.constant 0 : index
      %14 = vector.load %arg3[%c0_12, %c0_13] : memref<1x128xf32, #tpu.memory_space<vmem>>, vector<1x128xf32>
      %15 = vector.broadcast %14 : vector<1x128xf32> to vector<8x128xf32>
      %16 = arith.addf %13, %15 : vector<8x128xf32>
      %17 = arith.mulf %16, %16 : vector<8x128xf32>
      %cst_14 = arith.constant dense<0.000000e+00> : vector<8xf32>
      %18 = vector.multi_reduction <add>, %17, %cst_14 [1] : vector<8x128xf32> to vector<8xf32>
      %19 = vector.shape_cast %18 : vector<8xf32> to vector<8x1xf32>
      %cst_15 = arith.constant 1.000000e-24 : f32
      %20 = vector.broadcast %cst_15 : f32 to vector<8x1xf32>
      %21 = arith.maximumf %19, %20 : vector<8x1xf32>
      %22 = math.rsqrt %21 : vector<8x1xf32>
      %23 = vector.broadcast %22 : vector<8x1xf32> to vector<8x128xf32>
      %24 = arith.mulf %16, %23 : vector<8x128xf32>
      %c0_16 = arith.constant 0 : index
      %c0_17 = arith.constant 0 : index
      %25 = vector.load %arg4[%c0_16, %c0_17] : memref<128x128xf32, #tpu.memory_space<vmem>>, vector<128x128xf32>
      %cst_18 = arith.constant dense<0.000000e+00> : vector<8x128xf32>
      %26 = tpu.matmul %24, %25, %cst_18 {dimension_numbers = #tpu.dot_dimension_numbers<[1], [0], [0], [1], [0, 0, 1, 1], [], []>} : vector<8x128xf32>, vector<128x128xf32>, vector<8x128xf32> -> vector<8x128xf32>
      %c0_19 = arith.constant 0 : index
      %c0_20 = arith.constant 0 : index
      %27 = vector.load %arg5[%c0_19, %c0_20] : memref<1x128xf32, #tpu.memory_space<vmem>>, vector<1x128xf32>
      %28 = vector.broadcast %27 : vector<1x128xf32> to vector<8x128xf32>
      %29 = arith.addf %26, %28 : vector<8x128xf32>
      %cst_21 = arith.constant 0.000000e+00 : f32
      %30 = vector.broadcast %cst_21 : f32 to vector<8x128xf32>
      %31 = arith.maximumf %29, %30 : vector<8x128xf32>
      %c0_22 = arith.constant 0 : index
      %c0_23 = arith.constant 0 : index
      %32 = vector.load %arg6[%c0_22, %c0_23] : memref<128x128xf32, #tpu.memory_space<vmem>>, vector<128x128xf32>
      %cst_24 = arith.constant dense<0.000000e+00> : vector<8x128xf32>
      %33 = tpu.matmul %31, %32, %cst_24 {dimension_numbers = #tpu.dot_dimension_numbers<[1], [0], [0], [1], [0, 0, 1, 1], [], []>} : vector<8x128xf32>, vector<128x128xf32>, vector<8x128xf32> -> vector<8x128xf32>
      %c0_25 = arith.constant 0 : index
      %c0_26 = arith.constant 0 : index
      %34 = vector.load %arg7[%c0_25, %c0_26] : memref<1x128xf32, #tpu.memory_space<vmem>>, vector<1x128xf32>
      %35 = vector.broadcast %34 : vector<1x128xf32> to vector<8x128xf32>
      %36 = arith.addf %33, %35 : vector<8x128xf32>
      %c0_27 = arith.constant 0 : index
      %c0_28 = arith.constant 0 : index
      %37 = vector.load %arg8[%c0_27, %c0_28] : memref<8x128xf32, #tpu.memory_space<vmem>>, vector<8x128xf32>
      tpu.vector_store %arg8[%c0_27, %c0_28], %36 {strides = array<i32>} : memref<8x128xf32, #tpu.memory_space<vmem>>, vector<8x128xf32>,
    } else {
    }
    return
  }
  func.func @transform_0(%arg0: i32) -> (i32, i32) {
    %c0_i32 = arith.constant 0 : i32
    %c0_i32_0 = arith.constant 0 : i32
    return %c0_i32, %arg0 : i32, i32
  }
  func.func @transform_1(%arg0: i32) -> (i32, i32) {
    %c0_i32 = arith.constant 0 : i32
    %c0_i32_0 = arith.constant 0 : i32
    return %arg0, %c0_i32 : i32, i32
  }
  func.func @transform_2(%arg0: i32) -> (i32, i32) {
    %c0_i32 = arith.constant 0 : i32
    %c0_i32_0 = arith.constant 0 : i32
    %c0_i32_1 = arith.constant 0 : i32
    return %c0_i32, %c0_i32_0 : i32, i32
  }
  func.func @transform_3(%arg0: i32) -> (i32, i32) {
    %c0_i32 = arith.constant 0 : i32
    %c0_i32_0 = arith.constant 0 : i32
    %c0_i32_1 = arith.constant 0 : i32
    return %c0_i32, %c0_i32_0 : i32, i32
  }
  func.func @transform_4(%arg0: i32) -> (i32, i32) {
    %c0_i32 = arith.constant 0 : i32
    %c0_i32_0 = arith.constant 0 : i32
    %c0_i32_1 = arith.constant 0 : i32
    return %c0_i32, %c0_i32_0 : i32, i32
  }
  func.func @transform_5(%arg0: i32) -> (i32, i32) {
    %c0_i32 = arith.constant 0 : i32
    %c0_i32_0 = arith.constant 0 : i32
    %c0_i32_1 = arith.constant 0 : i32
    return %c0_i32, %c0_i32_0 : i32, i32
  }
  func.func @transform_6(%arg0: i32) -> (i32, i32) {
    %c0_i32 = arith.constant 0 : i32
    %c0_i32_0 = arith.constant 0 : i32
    %c0_i32_1 = arith.constant 0 : i32
    return %c0_i32, %c0_i32_0 : i32, i32
  }
  func.func @transform_7(%arg0: i32) -> (i32, i32) {
    %c0_i32 = arith.constant 0 : i32
    %c0_i32_0 = arith.constant 0 : i32
    %c0_i32_1 = arith.constant 0 : i32
    return %c0_i32, %c0_i32_0 : i32, i32
  }
}

</mosaic_0001>

<llo_original>
// kernel: tpu_custom_call.1
$region0: #{tpu_custom_call.1}
  #allocation0 [shape = 'u32[]', space=smem, size = 0x4, offset = 0x4, fixed_abs, tag = 'smem constant byte address 0x4 - core index']
  #allocation1 [shape = 'u32[144,128]{1,0:T(1,128)}', space=vmem, size = 0x12000, scoped, tag = 'internal scratch']
  #allocation2 [shape = 'f32[8,128]{1,0:T(8,128)}', space=vmem, size = 0x1000, scoped, tag = 'scratch operand']
  %s0 = inlined_call_operand.hbm [shape: f32[8,1024], index: 0, kind: input, shape index: {}]
  %s1 = inlined_call_operand.hbm [shape: bf16[1024,128], index: 1, kind: input, shape index: {}]
  %s2 = inlined_call_operand.vmem [shape: f32[1,128], index: 2, kind: input, shape index: {}]
  %s3 = inlined_call_operand.hbm [shape: f32[128,128], index: 3, kind: input, shape index: {}]
  %s4 = inlined_call_operand.vmem [shape: f32[1,128], index: 4, kind: input, shape index: {}]
  %s5 = inlined_call_operand.hbm [shape: f32[128,128], index: 5, kind: input, shape index: {}]
  %s6 = inlined_call_operand.vmem [shape: f32[1,128], index: 6, kind: input, shape index: {}]
  %s7 = inlined_call_operand.hbm [shape: f32[8,128], index: 7, kind: output, shape index: {}]
  %s8 = sld [smem:[#allocation0]]
  $region62: #{tpu_custom_call.1} parent=0
    _
  %s10 = ssub.s32 1, %s8
  %s11 = scalar_select 0, %s10, %s8
  $region1: #{tpu_custom_call.1} parent=0
    #allocation3 [shape = 'u8[32768]{0}', space=vmem, size = 0x8000, scoped, tag = 'input window, operand 0, single buffered']
    #allocation4 [shape = 's32[1]{0}', space=sflag, size = 0x4, scoped, tag = 'scoped memory for tpu_custom_call.1']
    #allocation5 [shape = 's32[1]{0}', space=sflag, size = 0x4, scoped, tag = 'scoped memory for tpu_custom_call.1']
    #allocation6 [shape = 'u8[262144]{0}', space=vmem, size = 0x40000, scoped, tag = 'input window, operand 1, single buffered']
    #allocation7 [shape = 's32[1]{0}', space=sflag, size = 0x4, scoped, tag = 'scoped memory for tpu_custom_call.1']
    #allocation8 [shape = 'u8[65536]{0}', space=vmem, size = 0x10000, scoped, tag = 'input window, operand 3, single buffered']
    #allocation9 [shape = 'u8[65536]{0}', space=vmem, size = 0x10000, scoped, tag = 'input window, operand 5, single buffered']
    #allocation10 [shape = 's32[1]{0}', space=sflag, size = 0x4, scoped, tag = 'scoped memory for tpu_custom_call.1']
    #allocation11 [shape = 'u8[4096]{0}', space=vmem, size = 0x1000, scoped, tag = 'output window, operand 0, single buffered']
    %12 = vsyncpa [#allocation4], 0
    %13 = vsyncpa [#allocation7], 0
    %14 = vsyncpa [#allocation10], 0
    %15 = vsyncpa [#allocation5], 0
    // Predicated region
    $region2: #{tpu_custom_call.1} parent=1 // pred_check
      _
    $region3: #{tpu_custom_call.1} parent=1 // pred_check_branch
      %17 = sbr.rel (0) target = $region5
    $region4: #{tpu_custom_call.1} parent=1 // pred_region
      %s19 = ssub.s32 1024, 1024
      %20 = vsyncadd [#allocation4], %s19
      %s22 = sshll.u32 [#allocation3], 4
      %s23 = int_to_ptr.vmem [resolvable:$true] %s22
      %25 = dma.hbm_to_vmem [thread:$0]  %s0, 1024, %s23, [#allocation4]
    $region5: #{tpu_custom_call.1} parent=1 // pred_fallthru
      _
    // Predicated region
    $region6: #{tpu_custom_call.1} parent=1 // pred_check
      _
    $region7: #{tpu_custom_call.1} parent=1 // pred_check_branch
      %27 = sbr.rel (0) target = $region9
    $region8: #{tpu_custom_call.1} parent=1 // pred_region
      %s29 = ssub.s32 8192, 8192
      %30 = vsyncadd [#allocation7], %s29
      %s31 = sshll.u32 [#allocation6], 4
      %s32 = int_to_ptr.vmem [resolvable:$true] %s31
      %37 = dma.hbm_to_vmem [thread:$0]  %s1, 8192, %s32, [#allocation7], 64, 64, 4
    $region9: #{tpu_custom_call.1} parent=1 // pred_fallthru
      _
    // Predicated region
    $region10: #{tpu_custom_call.1} parent=1 // pred_check
      _
    $region11: #{tpu_custom_call.1} parent=1 // pred_check_branch
      %39 = sbr.rel (0) target = $region13
    $region12: #{tpu_custom_call.1} parent=1 // pred_region
      _
    $region13: #{tpu_custom_call.1} parent=1 // pred_fallthru
      _
    // Predicated region
    $region14: #{tpu_custom_call.1} parent=1 // pred_check
      _
    $region15: #{tpu_custom_call.1} parent=1 // pred_check_branch
      %41 = sbr.rel (0) target = $region17
    $region16: #{tpu_custom_call.1} parent=1 // pred_region
      %s43 = ssub.s32 2048, 2048
      %44 = vsyncadd [#allocation7], %s43
      %s45 = sshll.u32 [#allocation8], 4
      %s46 = int_to_ptr.vmem [resolvable:$true] %s45
      %51 = dma.hbm_to_vmem [thread:$0]  %s3, 2048, %s46, [#allocation7], 128, 128, 8
    $region17: #{tpu_custom_call.1} parent=1 // pred_fallthru
      _
    // Predicated region
    $region18: #{tpu_custom_call.1} parent=1 // pred_check
      _
    $region19: #{tpu_custom_call.1} parent=1 // pred_check_branch
      %53 = sbr.rel (0) target = $region21
    $region20: #{tpu_custom_call.1} parent=1 // pred_region
      _
    $region21: #{tpu_custom_call.1} parent=1 // pred_fallthru
      _
    // Predicated region
    $region22: #{tpu_custom_call.1} parent=1 // pred_check
      _
    $region23: #{tpu_custom_call.1} parent=1 // pred_check_branch
      %55 = sbr.rel (0) target = $region25
    $region24: #{tpu_custom_call.1} parent=1 // pred_region
      %s57 = ssub.s32 2048, 2048
      %58 = vsyncadd [#allocation10], %s57
      %s59 = sshll.u32 [#allocation9], 4
      %s60 = int_to_ptr.vmem [resolvable:$true] %s59
      %65 = dma.hbm_to_vmem [thread:$0]  %s5, 2048, %s60, [#allocation10], 128, 128, 8
    $region25: #{tpu_custom_call.1} parent=1 // pred_fallthru
      _
    // Predicated region
    $region26: #{tpu_custom_call.1} parent=1 // pred_check
      _
    $region27: #{tpu_custom_call.1} parent=1 // pred_check_branch
      %67 = sbr.rel (0) target = $region29
    $region28: #{tpu_custom_call.1} parent=1 // pred_region
      _
    $region29: #{tpu_custom_call.1} parent=1 // pred_fallthru
      _
    // Predicated region
    $region30: #{tpu_custom_call.1} parent=1 // pred_check
      _
    $region31: #{tpu_custom_call.1} parent=1 // pred_check_branch
      %69 = sbr.rel (0) target = $region33
    $region32: #{tpu_custom_call.1} parent=1 // pred_region
      %70 = dma.done [#allocation4], 1024
    $region33: #{tpu_custom_call.1} parent=1 // pred_fallthru
      _
    // Predicated region
    $region34: #{tpu_custom_call.1} parent=1 // pred_check
      _
    $region35: #{tpu_custom_call.1} parent=1 // pred_check_branch
      %72 = sbr.rel (0) target = $region37
    $region36: #{tpu_custom_call.1} parent=1 // pred_region
      %73 = dma.done [#allocation7], 8192
    $region37: #{tpu_custom_call.1} parent=1 // pred_fallthru
      _
    // Predicated region
    $region38: #{tpu_custom_call.1} parent=1 // pred_check
      _
    $region39: #{tpu_custom_call.1} parent=1 // pred_check_branch
      %75 = sbr.rel (0) target = $region41
    $region40: #{tpu_custom_call.1} parent=1 // pred_region
      %76 = dma.done [#allocation7], 2048
    $region41: #{tpu_custom_call.1} parent=1 // pred_fallthru
      _
    // Predicated region
    $region42: #{tpu_custom_call.1} parent=1 // pred_check
      _
    $region43: #{tpu_custom_call.1} parent=1 // pred_check_branch
      %78 = sbr.rel (0) target = $region45
    $region44: #{tpu_custom_call.1} parent=1 // pred_region
      %79 = dma.done [#allocation10], 2048
    $region45: #{tpu_custom_call.1} parent=1 // pred_fallthru
      _
    %p81 = scmp.eq.s32.totalorder 0, 0
    // Predicated region
    $region46: #{tpu_custom_call.1} parent=1 // pred_check
      %p82 = pneg %p81
    $region47: #{tpu_custom_call.1} parent=1 // pred_check_branch
      %84 = sbr.rel (%p82) target = $region49
    $region48: #{tpu_custom_call.1} parent=1 // pred_region
      %85 = vst [vmem:[#allocation2] sm:$0xff] 0.0
    $region49: #{tpu_custom_call.1} parent=1 // pred_fallthru
      _
    %v86 = vld [vmem:[#allocation2] sm:$0xff]
    %v87 = vld [vmem:[#allocation3] sm:$0xff]
    %v88 = vld [vmem:[#allocation3 + $0x8] sm:$0xff]
    %v89 = vld [vmem:[#allocation3 + $0x10] sm:$0xff]
    %v90 = vld [vmem:[#allocation3 + $0x18] sm:$0xff]
    %v91 = vld [vmem:[#allocation3 + $0x20] sm:$0xff]
    %v92 = vld [vmem:[#allocation3 + $0x28] sm:$0xff]
    %v93 = vld [vmem:[#allocation3 + $0x30] sm:$0xff]
    %v94 = vld [vmem:[#allocation3 + $0x38] sm:$0xff]
    %v95 = vpack.c.bf16 %v87, %v87
    %v96 = vpack.c.bf16 %v88, %v88
    %v97 = vpack.c.bf16 %v89, %v89
    %v98 = vpack.c.bf16 %v90, %v90
    %v99 = vpack.c.bf16 %v91, %v91
    %v100 = vpack.c.bf16 %v92, %v92
    %v101 = vpack.c.bf16 %v93, %v93
    %v102 = vpack.c.bf16 %v94, %v94
    %v103 = vld [vmem:[#allocation6] sm:$0xf]
    %v104 = vld [vmem:[#allocation6 + $0x4] sm:$0xf]
    %v105 = vld [vmem:[#allocation6 + $0x8] sm:$0xf]
    %v106 = vld [vmem:[#allocation6 + $0xc] sm:$0xf]
    %v107 = vld [vmem:[#allocation6 + $0x10] sm:$0xf]
    %v108 = vld [vmem:[#allocation6 + $0x14] sm:$0xf]
    %v109 = vld [vmem:[#allocation6 + $0x18] sm:$0xf]
    %v110 = vld [vmem:[#allocation6 + $0x1c] sm:$0xf]
    %v111 = vld [vmem:[#allocation6 + $0x20] sm:$0xf]
    %v112 = vld [vmem:[#allocation6 + $0x24] sm:$0xf]
    %v113 = vld [vmem:[#allocation6 + $0x28] sm:$0xf]
    %v114 = vld [vmem:[#allocation6 + $0x2c] sm:$0xf]
    %v115 = vld [vmem:[#allocation6 + $0x30] sm:$0xf]
    %v116 = vld [vmem:[#allocation6 + $0x34] sm:$0xf]
    %v117 = vld [vmem:[#allocation6 + $0x38] sm:$0xf]
    %v118 = vld [vmem:[#allocation6 + $0x3c] sm:$0xf]
    %v119 = vld [vmem:[#allocation6 + $0x40] sm:$0xf]
    %v120 = vld [vmem:[#allocation6 + $0x44] sm:$0xf]
    %v121 = vld [vmem:[#allocation6 + $0x48] sm:$0xf]
    %v122 = vld [vmem:[#allocation6 + $0x4c] sm:$0xf]
    %v123 = vld [vmem:[#allocation6 + $0x50] sm:$0xf]
    %v124 = vld [vmem:[#allocation6 + $0x54] sm:$0xf]
    %v125 = vld [vmem:[#allocation6 + $0x58] sm:$0xf]
    %v126 = vld [vmem:[#allocation6 + $0x5c] sm:$0xf]
    %v127 = vld [vmem:[#allocation6 + $0x60] sm:$0xf]
    %v128 = vld [vmem:[#allocation6 + $0x64] sm:$0xf]
    %v129 = vld [vmem:[#allocation6 + $0x68] sm:$0xf]
    %v130 = vld [vmem:[#allocation6 + $0x6c] sm:$0xf]
    %v131 = vld [vmem:[#allocation6 + $0x70] sm:$0xf]
    %v132 = vld [vmem:[#allocation6 + $0x74] sm:$0xf]
    %v133 = vld [vmem:[#allocation6 + $0x78] sm:$0xf]
    %v134 = vld [vmem:[#allocation6 + $0x7c] sm:$0xf]
    %v135 = vld [vmem:[#allocation6 + $0x80] sm:$0xf]
    %v136 = vld [vmem:[#allocation6 + $0x84] sm:$0xf]
    %v137 = vld [vmem:[#allocation6 + $0x88] sm:$0xf]
    %v138 = vld [vmem:[#allocation6 + $0x8c] sm:$0xf]
    %v139 = vld [vmem:[#allocation6 + $0x90] sm:$0xf]
    %v140 = vld [vmem:[#allocation6 + $0x94] sm:$0xf]
    %v141 = vld [vmem:[#allocation6 + $0x98] sm:$0xf]
    %v142 = vld [vmem:[#allocation6 + $0x9c] sm:$0xf]
    %v143 = vld [vmem:[#allocation6 + $0xa0] sm:$0xf]
    %v144 = vld [vmem:[#allocation6 + $0xa4] sm:$0xf]
    %v145 = vld [vmem:[#allocation6 + $0xa8] sm:$0xf]
    %v146 = vld [vmem:[#allocation6 + $0xac] sm:$0xf]
    %v147 = vld [vmem:[#allocation6 + $0xb0] sm:$0xf]
    %v148 = vld [vmem:[#allocation6 + $0xb4] sm:$0xf]
    %v149 = vld [vmem:[#allocation6 + $0xb8] sm:$0xf]
    %v150 = vld [vmem:[#allocation6 + $0xbc] sm:$0xf]
    %v151 = vld [vmem:[#allocation6 + $0xc0] sm:$0xf]
    %v152 = vld [vmem:[#allocation6 + $0xc4] sm:$0xf]
    %v153 = vld [vmem:[#allocation6 + $0xc8] sm:$0xf]
    %v154 = vld [vmem:[#allocation6 + $0xcc] sm:$0xf]
    %v155 = vld [vmem:[#allocation6 + $0xd0] sm:$0xf]
    %v156 = vld [vmem:[#allocation6 + $0xd4] sm:$0xf]
    %v157 = vld [vmem:[#allocation6 + $0xd8] sm:$0xf]
    %v158 = vld [vmem:[#allocation6 + $0xdc] sm:$0xf]
    %v159 = vld [vmem:[#allocation6 + $0xe0] sm:$0xf]
    %v160 = vld [vmem:[#allocation6 + $0xe4] sm:$0xf]
    %v161 = vld [vmem:[#allocation6 + $0xe8] sm:$0xf]
    %v162 = vld [vmem:[#allocation6 + $0xec] sm:$0xf]
    %v163 = vld [vmem:[#allocation6 + $0xf0] sm:$0xf]
    %v164 = vld [vmem:[#allocation6 + $0xf4] sm:$0xf]
    %v165 = vld [vmem:[#allocation6 + $0xf8] sm:$0xf]
    %v166 = vld [vmem:[#allocation6 + $0xfc] sm:$0xf]
    %v167 = vld [vmem:[#allocation6 + $0x100] sm:$0xf]
    %v168 = vld [vmem:[#allocation6 + $0x104] sm:$0xf]
    %v169 = vld [vmem:[#allocation6 + $0x108] sm:$0xf]
    %v170 = vld [vmem:[#allocation6 + $0x10c] sm:$0xf]
    %v171 = vld [vmem:[#allocation6 + $0x110] sm:$0xf]
    %v172 = vld [vmem:[#allocation6 + $0x114] sm:$0xf]
    %v173 = vld [vmem:[#allocation6 + $0x118] sm:$0xf]
    %v174 = vld [vmem:[#allocation6 + $0x11c] sm:$0xf]
    %v175 = vld [vmem:[#allocation6 + $0x120] sm:$0xf]
    %v176 = vld [vmem:[#allocation6 + $0x124] sm:$0xf]
    %v177 = vld [vmem:[#allocation6 + $0x128] sm:$0xf]
    %v178 = vld [vmem:[#allocation6 + $0x12c] sm:$0xf]
    %v179 = vld [vmem:[#allocation6 + $0x130] sm:$0xf]
    %v180 = vld [vmem:[#allocation6 + $0x134] sm:$0xf]
    %v181 = vld [vmem:[#allocation6 + $0x138] sm:$0xf]
    %v182 = vld [vmem:[#allocation6 + $0x13c] sm:$0xf]
    %v183 = vld [vmem:[#allocation6 + $0x140] sm:$0xf]
    %v184 = vld [vmem:[#allocation6 + $0x144] sm:$0xf]
    %v185 = vld [vmem:[#allocation6 + $0x148] sm:$0xf]
    %v186 = vld [vmem:[#allocation6 + $0x14c] sm:$0xf]
    %v187 = vld [vmem:[#allocation6 + $0x150] sm:$0xf]
    %v188 = vld [vmem:[#allocation6 + $0x154] sm:$0xf]
    %v189 = vld [vmem:[#allocation6 + $0x158] sm:$0xf]
    %v190 = vld [vmem:[#allocation6 + $0x15c] sm:$0xf]
    %v191 = vld [vmem:[#allocation6 + $0x160] sm:$0xf]
    %v192 = vld [vmem:[#allocation6 + $0x164] sm:$0xf]
    %v193 = vld [vmem:[#allocation6 + $0x168] sm:$0xf]
    %v194 = vld [vmem:[#allocation6 + $0x16c] sm:$0xf]
    %v195 = vld [vmem:[#allocation6 + $0x170] sm:$0xf]
    %v196 = vld [vmem:[#allocation6 + $0x174] sm:$0xf]
    %v197 = vld [vmem:[#allocation6 + $0x178] sm:$0xf]
    %v198 = vld [vmem:[#allocation6 + $0x17c] sm:$0xf]
    %v199 = vld [vmem:[#allocation6 + $0x180] sm:$0xf]
    %v200 = vld [vmem:[#allocation6 + $0x184] sm:$0xf]
    %v201 = vld [vmem:[#allocation6 + $0x188] sm:$0xf]
    %v202 = vld [vmem:[#allocation6 + $0x18c] sm:$0xf]
    %v203 = vld [vmem:[#allocation6 + $0x190] sm:$0xf]
    %v204 = vld [vmem:[#allocation6 + $0x194] sm:$0xf]
    %v205 = vld [vmem:[#allocation6 + $0x198] sm:$0xf]
    %v206 = vld [vmem:[#allocation6 + $0x19c] sm:$0xf]
    %v207 = vld [vmem:[#allocation6 + $0x1a0] sm:$0xf]
    %v208 = vld [vmem:[#allocation6 + $0x1a4] sm:$0xf]
    %v209 = vld [vmem:[#allocation6 + $0x1a8] sm:$0xf]
    %v210 = vld [vmem:[#allocation6 + $0x1ac] sm:$0xf]
    %v211 = vld [vmem:[#allocation6 + $0x1b0] sm:$0xf]
    %v212 = vld [vmem:[#allocation6 + $0x1b4] sm:$0xf]
    %v213 = vld [vmem:[#allocation6 + $0x1b8] sm:$0xf]
    %v214 = vld [vmem:[#allocation6 + $0x1bc] sm:$0xf]
    %v215 = vld [vmem:[#allocation6 + $0x1c0] sm:$0xf]
    %v216 = vld [vmem:[#allocation6 + $0x1c4] sm:$0xf]
    %v217 = vld [vmem:[#allocation6 + $0x1c8] sm:$0xf]
    %v218 = vld [vmem:[#allocation6 + $0x1cc] sm:$0xf]
    %v219 = vld [vmem:[#allocation6 + $0x1d0] sm:$0xf]
    %v220 = vld [vmem:[#allocation6 + $0x1d4] sm:$0xf]
    %v221 = vld [vmem:[#allocation6 + $0x1d8] sm:$0xf]
    %v222 = vld [vmem:[#allocation6 + $0x1dc] sm:$0xf]
    %v223 = vld [vmem:[#allocation6 + $0x1e0] sm:$0xf]
    %v224 = vld [vmem:[#allocation6 + $0x1e4] sm:$0xf]
    %v225 = vld [vmem:[#allocation6 + $0x1e8] sm:$0xf]
    %v226 = vld [vmem:[#allocation6 + $0x1ec] sm:$0xf]
    %v227 = vld [vmem:[#allocation6 + $0x1f0] sm:$0xf]
    %v228 = vld [vmem:[#allocation6 + $0x1f4] sm:$0xf]
    %v229 = vld [vmem:[#allocation6 + $0x1f8] sm:$0xf]
    %v230 = vld [vmem:[#allocation6 + $0x1fc] sm:$0xf]
    %v359 = vunpack.c.l.b16 %v103
    %v360 = vunpack.c.l.b16 %v104
    %v361 = vunpack.c.l.b16 %v105
    %v362 = vunpack.c.l.b16 %v106
    %v363 = vunpack.c.l.b16 %v107
    %v364 = vunpack.c.l.b16 %v108
    %v365 = vunpack.c.l.b16 %v109
    %v366 = vunpack.c.l.b16 %v110
    %v367 = vunpack.c.l.b16 %v111
    %v368 = vunpack.c.l.b16 %v112
    %v369 = vunpack.c.l.b16 %v113
    %v370 = vunpack.c.l.b16 %v114
    %v371 = vunpack.c.l.b16 %v115
    %v372 = vunpack.c.l.b16 %v116
    %v373 = vunpack.c.l.b16 %v117
    %v374 = vunpack.c.l.b16 %v118
    %v375 = vunpack.c.l.b16 %v119
    %v376 = vunpack.c.l.b16 %v120
    %v377 = vunpack.c.l.b16 %v121
    %v378 = vunpack.c.l.b16 %v122
    %v379 = vunpack.c.l.b16 %v123
    %v380 = vunpack.c.l.b16 %v124
    %v381 = vunpack.c.l.b16 %v125
    %v382 = vunpack.c.l.b16 %v126
    %v383 = vunpack.c.l.b16 %v127
    %v384 = vunpack.c.l.b16 %v128
    %v385 = vunpack.c.l.b16 %v129
    %v386 = vunpack.c.l.b16 %v130
    %v387 = vunpack.c.l.b16 %v131
    %v388 = vunpack.c.l.b16 %v132
    %v389 = vunpack.c.l.b16 %v133
    %v390 = vunpack.c.l.b16 %v134
    %v391 = vunpack.c.l.b16 %v135
    %v392 = vunpack.c.l.b16 %v136
    %v393 = vunpack.c.l.b16 %v137
    %v394 = vunpack.c.l.b16 %v138
    %v395 = vunpack.c.l.b16 %v139
    %v396 = vunpack.c.l.b16 %v140
    %v397 = vunpack.c.l.b16 %v141
    %v398 = vunpack.c.l.b16 %v142
    %v399 = vunpack.c.l.b16 %v143
    %v400 = vunpack.c.l.b16 %v144
    %v401 = vunpack.c.l.b16 %v145
    %v402 = vunpack.c.l.b16 %v146
    %v403 = vunpack.c.l.b16 %v147
    %v404 = vunpack.c.l.b16 %v148
    %v405 = vunpack.c.l.b16 %v149
    %v406 = vunpack.c.l.b16 %v150
    %v407 = vunpack.c.l.b16 %v151
    %v408 = vunpack.c.l.b16 %v152
    %v409 = vunpack.c.l.b16 %v153
    %v410 = vunpack.c.l.b16 %v154
    %v411 = vunpack.c.l.b16 %v155
    %v412 = vunpack.c.l.b16 %v156
    %v413 = vunpack.c.l.b16 %v157
    %v414 = vunpack.c.l.b16 %v158
    %v415 = vunpack.c.l.b16 %v159
    %v416 = vunpack.c.l.b16 %v160
    %v417 = vunpack.c.l.b16 %v161
    %v418 = vunpack.c.l.b16 %v162
    %v419 = vunpack.c.l.b16 %v163
    %v420 = vunpack.c.l.b16 %v164
    %v421 = vunpack.c.l.b16 %v165
    %v422 = vunpack.c.l.b16 %v166
    %v423 = vunpack.c.l.b16 %v167
    %v424 = vunpack.c.l.b16 %v168
    %v425 = vunpack.c.l.b16 %v169
    %v426 = vunpack.c.l.b16 %v170
    %v427 = vunpack.c.l.b16 %v171
    %v428 = vunpack.c.l.b16 %v172
    %v429 = vunpack.c.l.b16 %v173
    %v430 = vunpack.c.l.b16 %v174
    %v431 = vunpack.c.l.b16 %v175
    %v432 = vunpack.c.l.b16 %v176
    %v433 = vunpack.c.l.b16 %v177
    %v434 = vunpack.c.l.b16 %v178
    %v435 = vunpack.c.l.b16 %v179
    %v436 = vunpack.c.l.b16 %v180
    %v437 = vunpack.c.l.b16 %v181
    %v438 = vunpack.c.l.b16 %v182
    %v439 = vunpack.c.l.b16 %v183
    %v440 = vunpack.c.l.b16 %v184
    %v441 = vunpack.c.l.b16 %v185
    %v442 = vunpack.c.l.b16 %v186
    %v443 = vunpack.c.l.b16 %v187
    %v444 = vunpack.c.l.b16 %v188
    %v445 = vunpack.c.l.b16 %v189
    %v446 = vunpack.c.l.b16 %v190
    %v447 = vunpack.c.l.b16 %v191
    %v448 = vunpack.c.l.b16 %v192
    %v449 = vunpack.c.l.b16 %v193
    %v450 = vunpack.c.l.b16 %v194
    %v451 = vunpack.c.l.b16 %v195
    %v452 = vunpack.c.l.b16 %v196
    %v453 = vunpack.c.l.b16 %v197
    %v454 = vunpack.c.l.b16 %v198
    %v455 = vunpack.c.l.b16 %v199
    %v456 = vunpack.c.l.b16 %v200
    %v457 = vunpack.c.l.b16 %v201
    %v458 = vunpack.c.l.b16 %v202
    %v459 = vunpack.c.l.b16 %v203
    %v460 = vunpack.c.l.b16 %v204
    %v461 = vunpack.c.l.b16 %v205
    %v462 = vunpack.c.l.b16 %v206
    %v463 = vunpack.c.l.b16 %v207
    %v464 = vunpack.c.l.b16 %v208
    %v465 = vunpack.c.l.b16 %v209
    %v466 = vunpack.c.l.b16 %v210
    %v467 = vunpack.c.l.b16 %v211
    %v468 = vunpack.c.l.b16 %v212
    %v469 = vunpack.c.l.b16 %v213
    %v470 = vunpack.c.l.b16 %v214
    %v471 = vunpack.c.l.b16 %v215
    %v472 = vunpack.c.l.b16 %v216
    %v473 = vunpack.c.l.b16 %v217
    %v474 = vunpack.c.l.b16 %v218
    %v475 = vunpack.c.l.b16 %v219
    %v476 = vunpack.c.l.b16 %v220
    %v477 = vunpack.c.l.b16 %v221
    %v478 = vunpack.c.l.b16 %v222
    %v479 = vunpack.c.l.b16 %v223
    %v480 = vunpack.c.l.b16 %v224
    %v481 = vunpack.c.l.b16 %v225
    %v482 = vunpack.c.l.b16 %v226
    %v483 = vunpack.c.l.b16 %v227
    %v484 = vunpack.c.l.b16 %v228
    %v485 = vunpack.c.l.b16 %v229
    %v486 = vunpack.c.l.b16 %v230
    %v487 = vpack.c.b16 %v360, %v359
    %v488 = vpack.c.b16 %v362, %v361
    %v489 = vpack.c.b16 %v364, %v363
    %v490 = vpack.c.b16 %v366, %v365
    %v491 = vpack.c.b16 %v368, %v367
    %v492 = vpack.c.b16 %v370, %v369
    %v493 = vpack.c.b16 %v372, %v371
    %v494 = vpack.c.b16 %v374, %v373
    %v495 = vpack.c.b16 %v376, %v375
    %v496 = vpack.c.b16 %v378, %v377
    %v497 = vpack.c.b16 %v380, %v379
    %v498 = vpack.c.b16 %v382, %v381
    %v499 = vpack.c.b16 %v384, %v383
    %v500 = vpack.c.b16 %v386, %v385
    %v501 = vpack.c.b16 %v388, %v387
    %v502 = vpack.c.b16 %v390, %v389
    %v503 = vpack.c.b16 %v392, %v391
    %v504 = vpack.c.b16 %v394, %v393
    %v505 = vpack.c.b16 %v396, %v395
    %v506 = vpack.c.b16 %v398, %v397
    %v507 = vpack.c.b16 %v400, %v399
    %v508 = vpack.c.b16 %v402, %v401
    %v509 = vpack.c.b16 %v404, %v403
    %v510 = vpack.c.b16 %v406, %v405
    %v511 = vpack.c.b16 %v408, %v407
    %v512 = vpack.c.b16 %v410, %v409
    %v513 = vpack.c.b16 %v412, %v411
    %v514 = vpack.c.b16 %v414, %v413
    %v515 = vpack.c.b16 %v416, %v415
    %v516 = vpack.c.b16 %v418, %v417
    %v517 = vpack.c.b16 %v420, %v419
    %v518 = vpack.c.b16 %v422, %v421
    %v519 = vpack.c.b16 %v424, %v423
    %v520 = vpack.c.b16 %v426, %v425
    %v521 = vpack.c.b16 %v428, %v427
    %v522 = vpack.c.b16 %v430, %v429
    %v523 = vpack.c.b16 %v432, %v431
    %v524 = vpack.c.b16 %v434, %v433
    %v525 = vpack.c.b16 %v436, %v435
    %v526 = vpack.c.b16 %v438, %v437
    %v527 = vpack.c.b16 %v440, %v439
    %v528 = vpack.c.b16 %v442, %v441
    %v529 = vpack.c.b16 %v444, %v443
    %v530 = vpack.c.b16 %v446, %v445
    %v531 = vpack.c.b16 %v448, %v447
    %v532 = vpack.c.b16 %v450, %v449
    %v533 = vpack.c.b16 %v452, %v451
    %v534 = vpack.c.b16 %v454, %v453
    %v535 = vpack.c.b16 %v456, %v455
    %v536 = vpack.c.b16 %v458, %v457
    %v537 = vpack.c.b16 %v460, %v459
    %v538 = vpack.c.b16 %v462, %v461
    %v539 = vpack.c.b16 %v464, %v463
    %v540 = vpack.c.b16 %v466, %v465
    %v541 = vpack.c.b16 %v468, %v467
    %v542 = vpack.c.b16 %v470, %v469
    %v543 = vpack.c.b16 %v472, %v471
    %v544 = vpack.c.b16 %v474, %v473
    %v545 = vpack.c.b16 %v476, %v475
    %v546 = vpack.c.b16 %v478, %v477
    %v547 = vpack.c.b16 %v480, %v479
    %v548 = vpack.c.b16 %v482, %v481
    %v549 = vpack.c.b16 %v484, %v483
    %v550 = vpack.c.b16 %v486, %v485
    %615 = vmatprep.subr.bf16.mxu0 0
    %616 = vmatpush1.bf16.msra.mxu0 %v487
    %617 = vmatprep.subr.bf16.mxu0 0
    %618 = vmatpush1.bf16.msra.mxu0 %v488
    %619 = vmatprep.subr.bf16.mxu0 0
    %620 = vmatpush1.bf16.msra.mxu0 %v489
    %621 = vmatprep.subr.bf16.mxu0 0
    %622 = vmatpush1.bf16.msra.mxu0 %v490
    %623 = vmatprep.subr.bf16.mxu0 0
    %624 = vmatpush1.bf16.msra.mxu0 %v491
    %625 = vmatprep.subr.bf16.mxu0 0
    %626 = vmatpush1.bf16.msra.mxu0 %v492
    %627 = vmatprep.subr.bf16.mxu0 0
    %628 = vmatpush1.bf16.msra.mxu0 %v493
    %629 = vmatprep.subr.bf16.mxu0 0
    %630 = vmatpush1.bf16.msra.mxu0 %v494
    %631 = vmatprep.subr.bf16.mxu0 0
    %632 = vmatpush1.bf16.msra.mxu0 %v495
    %633 = vmatprep.subr.bf16.mxu0 0
    %634 = vmatpush1.bf16.msra.mxu0 %v496
    %635 = vmatprep.subr.bf16.mxu0 0
    %636 = vmatpush1.bf16.msra.mxu0 %v497
    %637 = vmatprep.subr.bf16.mxu0 0
    %638 = vmatpush1.bf16.msra.mxu0 %v498
    %639 = vmatprep.subr.bf16.mxu0 0
    %640 = vmatpush1.bf16.msra.mxu0 %v499
    %641 = vmatprep.subr.bf16.mxu0 0
    %642 = vmatpush1.bf16.msra.mxu0 %v500
    %643 = vmatprep.subr.bf16.mxu0 0
    %644 = vmatpush1.bf16.msra.mxu0 %v501
    %645 = vmatprep.subr.bf16.mxu0 0
    %646 = vmatpush1.bf16.msra.mxu0 %v502
    %647 = vmatprep.mubr.bf16.mxu0 %v96
    %648 = vmatmul.mubr.bf16.gmra.mrb[0].mxu0 %v95
    %v649 = vpop.f32.mrb[0].mxu0
    %v650 = vadd.f32 0.0, %v649
    %v651 = vpop.f32.mrb[0].mxu0
    %v652 = vpop.f32.mrb[0].mxu0
    %v653 = vpop.f32.mrb[0].mxu0
    %654 = vdwg.mxu0
    %655 = vmatprep.subr.bf16.mxu0 0
    %656 = vmatpush1.bf16.msra.mxu0 %v503
    %657 = vmatprep.subr.bf16.mxu0 0
    %658 = vmatpush1.bf16.msra.mxu0 %v504
    %659 = vmatprep.subr.bf16.mxu0 0
    %660 = vmatpush1.bf16.msra.mxu0 %v505
    %661 = vmatprep.subr.bf16.mxu0 0
    %662 = vmatpush1.bf16.msra.mxu0 %v506
    %663 = vmatprep.subr.bf16.mxu0 0
    %664 = vmatpush1.bf16.msra.mxu0 %v507
    %665 = vmatprep.subr.bf16.mxu0 0
    %666 = vmatpush1.bf16.msra.mxu0 %v508
    %667 = vmatprep.subr.bf16.mxu0 0
    %668 = vmatpush1.bf16.msra.mxu0 %v509
    %669 = vmatprep.subr.bf16.mxu0 0
    %670 = vmatpush1.bf16.msra.mxu0 %v510
    %671 = vmatprep.subr.bf16.mxu0 0
    %672 = vmatpush1.bf16.msra.mxu0 %v511
    %673 = vmatprep.subr.bf16.mxu0 0
    %674 = vmatpush1.bf16.msra.mxu0 %v512
    %675 = vmatprep.subr.bf16.mxu0 0
    %676 = vmatpush1.bf16.msra.mxu0 %v513
    %677 = vmatprep.subr.bf16.mxu0 0
    %678 = vmatpush1.bf16.msra.mxu0 %v514
    %679 = vmatprep.subr.bf16.mxu0 0
    %680 = vmatpush1.bf16.msra.mxu0 %v515
    %681 = vmatprep.subr.bf16.mxu0 0
    %682 = vmatpush1.bf16.msra.mxu0 %v516
    %683 = vmatprep.subr.bf16.mxu0 0
    %684 = vmatpush1.bf16.msra.mxu0 %v517
    %685 = vmatprep.subr.bf16.mxu0 0
    %686 = vmatpush1.bf16.msra.mxu0 %v518
    %687 = vmatprep.mubr.bf16.mxu0 %v98
    %688 = vmatmul.mubr.bf16.gmra.mrb[0].mxu0 %v97
    %v689 = vpop.f32.mrb[0].mxu0
    %v690 = vadd.f32 %v650, %v689
    %v691 = vpop.f32.mrb[0].mxu0
    %v692 = vpop.f32.mrb[0].mxu0
    %v693 = vpop.f32.mrb[0].mxu0
    %694 = vdwg.mxu0
    %695 = vmatprep.subr.bf16.mxu0 0
    %696 = vmatpush1.bf16.msra.mxu0 %v519
    %697 = vmatprep.subr.bf16.mxu0 0
    %698 = vmatpush1.bf16.msra.mxu0 %v520
    %699 = vmatprep.subr.bf16.mxu0 0
    %700 = vmatpush1.bf16.msra.mxu0 %v521
    %701 = vmatprep.subr.bf16.mxu0 0
    %702 = vmatpush1.bf16.msra.mxu0 %v522
    %703 = vmatprep.subr.bf16.mxu0 0
    %704 = vmatpush1.bf16.msra.mxu0 %v523
    %705 = vmatprep.subr.bf16.mxu0 0
    %706 = vmatpush1.bf16.msra.mxu0 %v524
    %707 = vmatprep.subr.bf16.mxu0 0
    %708 = vmatpush1.bf16.msra.mxu0 %v525
    %709 = vmatprep.subr.bf16.mxu0 0
    %710 = vmatpush1.bf16.msra.mxu0 %v526
    %711 = vmatprep.subr.bf16.mxu0 0
    %712 = vmatpush1.bf16.msra.mxu0 %v527
    %713 = vmatprep.subr.bf16.mxu0 0
    %714 = vmatpush1.bf16.msra.mxu0 %v528
    %715 = vmatprep.subr.bf16.mxu0 0
    %716 = vmatpush1.bf16.msra.mxu0 %v529
    %717 = vmatprep.subr.bf16.mxu0 0
    %718 = vmatpush1.bf16.msra.mxu0 %v530
    %719 = vmatprep.subr.bf16.mxu0 0
    %720 = vmatpush1.bf16.msra.mxu0 %v531
    %721 = vmatprep.subr.bf16.mxu0 0
    %722 = vmatpush1.bf16.msra.mxu0 %v532
    %723 = vmatprep.subr.bf16.mxu0 0
    %724 = vmatpush1.bf16.msra.mxu0 %v533
    %725 = vmatprep.subr.bf16.mxu0 0
    %726 = vmatpush1.bf16.msra.mxu0 %v534
    %727 = vmatprep.mubr.bf16.mxu0 %v100
    %728 = vmatmul.mubr.bf16.gmra.mrb[0].mxu0 %v99
    %v729 = vpop.f32.mrb[0].mxu0
    %v730 = vadd.f32 %v690, %v729
    %v731 = vpop.f32.mrb[0].mxu0
    %v732 = vpop.f32.mrb[0].mxu0
    %v733 = vpop.f32.mrb[0].mxu0
    %734 = vdwg.mxu0
    %735 = vmatprep.subr.bf16.mxu0 0
    %736 = vmatpush1.bf16.msra.mxu0 %v535
    %737 = vmatprep.subr.bf16.mxu0 0
    %738 = vmatpush1.bf16.msra.mxu0 %v536
    %739 = vmatprep.subr.bf16.mxu0 0
    %740 = vmatpush1.bf16.msra.mxu0 %v537
    %741 = vmatprep.subr.bf16.mxu0 0
    %742 = vmatpush1.bf16.msra.mxu0 %v538
    %743 = vmatprep.subr.bf16.mxu0 0
    %744 = vmatpush1.bf16.msra.mxu0 %v539
    %745 = vmatprep.subr.bf16.mxu0 0
    %746 = vmatpush1.bf16.msra.mxu0 %v540
    %747 = vmatprep.subr.bf16.mxu0 0
    %748 = vmatpush1.bf16.msra.mxu0 %v541
    %749 = vmatprep.subr.bf16.mxu0 0
    %750 = vmatpush1.bf16.msra.mxu0 %v542
    %751 = vmatprep.subr.bf16.mxu0 0
    %752 = vmatpush1.bf16.msra.mxu0 %v543
    %753 = vmatprep.subr.bf16.mxu0 0
    %754 = vmatpush1.bf16.msra.mxu0 %v544
    %755 = vmatprep.subr.bf16.mxu0 0
    %756 = vmatpush1.bf16.msra.mxu0 %v545
    %757 = vmatprep.subr.bf16.mxu0 0
    %758 = vmatpush1.bf16.msra.mxu0 %v546
    %759 = vmatprep.subr.bf16.mxu0 0
    %760 = vmatpush1.bf16.msra.mxu0 %v547
    %761 = vmatprep.subr.bf16.mxu0 0
    %762 = vmatpush1.bf16.msra.mxu0 %v548
    %763 = vmatprep.subr.bf16.mxu0 0
    %764 = vmatpush1.bf16.msra.mxu0 %v549
    %765 = vmatprep.subr.bf16.mxu0 0
    %766 = vmatpush1.bf16.msra.mxu0 %v550
    %767 = vmatprep.mubr.bf16.mxu0 %v102
    %768 = vmatmul.mubr.bf16.gmra.mrb[0].mxu0 %v101
    %v769 = vpop.f32.mrb[0].mxu0
    %v770 = vadd.f32 %v730, %v769
    %v771 = vpop.f32.mrb[0].mxu0
    %v772 = vpop.f32.mrb[0].mxu0
    %v773 = vpop.f32.mrb[0].mxu0
    %774 = vdwg.mxu0
    %v775 = vadd.f32 %v86, %v770
    %776 = vst [vmem:[#allocation2] sm:$0xff] %v775
    // Predicated region
    $region50: #{tpu_custom_call.1} parent=1 // pred_check
      %p777 = pneg %p81
    $region51: #{tpu_custom_call.1} parent=1 // pred_check_branch
      %779 = sbr.rel (%p777) target = $region53
    $region52: #{tpu_custom_call.1} parent=1 // pred_region
      %v780 = vld [vmem:[#allocation2] sm:$0xff]
      %v781 = vld [vmem:[%s2] sm:$0x1]
      %v783 = vlaneseq
      %v784 = vshrl.u32 %v783, 7
      %v785 = vsub.s32 0, %v784
      %v786 = vrot.slane %v781, %v785
      %v788 = vadd.f32 %v780, %v786
      %v789 = vmul.f32 %v788, %v788
      %790 = vadd.xlane.f32.xlu0 %v789
      %v791 = vpop.xlane.xlu0 %790
      %v792 = vmax.f32 %v791, 1e-24
      %v793 = vrsqrt.pop %v792
      %v794 = vmul.f32 %v788, %v793
      %v795 = vld [vmem:[#allocation8] sm:$0xff]
      %v796 = vld [vmem:[#allocation8 + $0x8] sm:$0xff]
      %v797 = vld [vmem:[#allocation8 + $0x10] sm:$0xff]
      %v798 = vld [vmem:[#allocation8 + $0x18] sm:$0xff]
      %v799 = vld [vmem:[#allocation8 + $0x20] sm:$0xff]
      %v800 = vld [vmem:[#allocation8 + $0x28] sm:$0xff]
      %v801 = vld [vmem:[#allocation8 + $0x30] sm:$0xff]
      %v802 = vld [vmem:[#allocation8 + $0x38] sm:$0xff]
      %v803 = vld [vmem:[#allocation8 + $0x40] sm:$0xff]
      %v804 = vld [vmem:[#allocation8 + $0x48] sm:$0xff]
      %v805 = vld [vmem:[#allocation8 + $0x50] sm:$0xff]
      %v806 = vld [vmem:[#allocation8 + $0x58] sm:$0xff]
      %v807 = vld [vmem:[#allocation8 + $0x60] sm:$0xff]
      %v808 = vld [vmem:[#allocation8 + $0x68] sm:$0xff]
      %v809 = vld [vmem:[#allocation8 + $0x70] sm:$0xff]
      %v810 = vld [vmem:[#allocation8 + $0x78] sm:$0xff]
      %v811 = vld [vmem:[%s4] sm:$0x1]
      %v813 = vlaneseq
      %v814 = vshrl.u32 %v813, 7
      %v815 = vsub.s32 0, %v814
      %v816 = vrot.slane %v811, %v815
      %818 = vmatprep.subr.mxu0 0.0
      %819 = vmatpush1.msra.mxu0 %v795
      %820 = vmatprep.subr.mxu0 0.0
      %821 = vmatpush1.msra.mxu0 %v796
      %822 = vmatprep.subr.mxu0 0.0
      %823 = vmatpush1.msra.mxu0 %v797
      %824 = vmatprep.subr.mxu0 0.0
      %825 = vmatpush1.msra.mxu0 %v798
      %826 = vmatprep.subr.mxu0 0.0
      %827 = vmatpush1.msra.mxu0 %v799
      %828 = vmatprep.subr.mxu0 0.0
      %829 = vmatpush1.msra.mxu0 %v800
      %830 = vmatprep.subr.mxu0 0.0
      %831 = vmatpush1.msra.mxu0 %v801
      %832 = vmatprep.subr.mxu0 0.0
      %833 = vmatpush1.msra.mxu0 %v802
      %834 = vmatprep.subr.mxu0 0.0
      %835 = vmatpush1.msra.mxu0 %v803
      %836 = vmatprep.subr.mxu0 0.0
      %837 = vmatpush1.msra.mxu0 %v804
      %838 = vmatprep.subr.mxu0 0.0
      %839 = vmatpush1.msra.mxu0 %v805
      %840 = vmatprep.subr.mxu0 0.0
      %841 = vmatpush1.msra.mxu0 %v806
      %842 = vmatprep.subr.mxu0 0.0
      %843 = vmatpush1.msra.mxu0 %v807
      %844 = vmatprep.subr.mxu0 0.0
      %845 = vmatpush1.msra.mxu0 %v808
      %846 = vmatprep.subr.mxu0 0.0
      %847 = vmatpush1.msra.mxu0 %v809
      %848 = vmatprep.subr.mxu0 0.0
      %849 = vmatpush1.msra.mxu0 %v810
      %850 = vmatprep.subr.mxu0 0.0
      %851 = vmatpush1.msra.mxu0 0.0
      %852 = vmatprep.subr.mxu0 0.0
      %853 = vmatpush1.msra.mxu0 0.0
      %854 = vmatprep.subr.mxu0 0.0
      %855 = vmatpush1.msra.mxu0 0.0
      %856 = vmatprep.subr.mxu0 0.0
      %857 = vmatpush1.msra.mxu0 0.0
      %858 = vmatprep.subr.mxu0 0.0
      %859 = vmatpush1.msra.mxu0 0.0
      %860 = vmatprep.subr.mxu0 0.0
      %861 = vmatpush1.msra.mxu0 0.0
      %862 = vmatprep.subr.mxu0 0.0
      %863 = vmatpush1.msra.mxu0 0.0
      %864 = vmatprep.subr.mxu0 0.0
      %865 = vmatpush1.msra.mxu0 0.0
      %866 = vmatprep.subr.mxu0 0.0
      %867 = vmatpush1.msra.mxu0 0.0
      %868 = vmatprep.subr.mxu0 0.0
      %869 = vmatpush1.msra.mxu0 0.0
      %870 = vmatprep.subr.mxu0 0.0
      %871 = vmatpush1.msra.mxu0 0.0
      %872 = vmatprep.subr.mxu0 0.0
      %873 = vmatpush1.msra.mxu0 0.0
      %874 = vmatprep.subr.mxu0 0.0
      %875 = vmatpush1.msra.mxu0 0.0
      %876 = vmatprep.subr.mxu0 0.0
      %877 = vmatpush1.msra.mxu0 0.0
      %878 = vmatprep.subr.mxu0 0.0
      %879 = vmatpush1.msra.mxu0 0.0
      %880 = vmatprep.subr.mxu0 0.0
      %881 = vmatpush1.msra.mxu0 0.0
      %882 = vmatprep.mubr.f32.mxu0 0.0
      %883 = vmatmul.mubr.f32.gmra.mrb[0].mxu0 %v794
      %v884 = vpop.f32.mrb[0].mxu0
      %v885 = vadd.f32 %v816, %v884
      %v886 = vpop.f32.mrb[0].mxu0
      %887 = vdwg.mxu0
      %v888 = vmax.f32 %v885, 0.0
      %v889 = vld [vmem:[#allocation9] sm:$0xff]
      %v890 = vld [vmem:[#allocation9 + $0x8] sm:$0xff]
      %v891 = vld [vmem:[#allocation9 + $0x10] sm:$0xff]
      %v892 = vld [vmem:[#allocation9 + $0x18] sm:$0xff]
      %v893 = vld [vmem:[#allocation9 + $0x20] sm:$0xff]
      %v894 = vld [vmem:[#allocation9 + $0x28] sm:$0xff]
      %v895 = vld [vmem:[#allocation9 + $0x30] sm:$0xff]
      %v896 = vld [vmem:[#allocation9 + $0x38] sm:$0xff]
      %v897 = vld [vmem:[#allocation9 + $0x40] sm:$0xff]
      %v898 = vld [vmem:[#allocation9 + $0x48] sm:$0xff]
      %v899 = vld [vmem:[#allocation9 + $0x50] sm:$0xff]
      %v900 = vld [vmem:[#allocation9 + $0x58] sm:$0xff]
      %v901 = vld [vmem:[#allocation9 + $0x60] sm:$0xff]
      %v902 = vld [vmem:[#allocation9 + $0x68] sm:$0xff]
      %v903 = vld [vmem:[#allocation9 + $0x70] sm:$0xff]
      %v904 = vld [vmem:[#allocation9 + $0x78] sm:$0xff]
      %v905 = vld [vmem:[%s6] sm:$0x1]
      %v907 = vlaneseq
      %v908 = vshrl.u32 %v907, 7
      %v909 = vsub.s32 0, %v908
      %v910 = vrot.slane %v905, %v909
      %912 = vmatprep.subr.mxu0 0.0
      %913 = vmatpush1.msra.mxu0 %v889
      %914 = vmatprep.subr.mxu0 0.0
      %915 = vmatpush1.msra.mxu0 %v890
      %916 = vmatprep.subr.mxu0 0.0
      %917 = vmatpush1.msra.mxu0 %v891
      %918 = vmatprep.subr.mxu0 0.0
      %919 = vmatpush1.msra.mxu0 %v892
      %920 = vmatprep.subr.mxu0 0.0
      %921 = vmatpush1.msra.mxu0 %v893
      %922 = vmatprep.subr.mxu0 0.0
      %923 = vmatpush1.msra.mxu0 %v894
      %924 = vmatprep.subr.mxu0 0.0
      %925 = vmatpush1.msra.mxu0 %v895
      %926 = vmatprep.subr.mxu0 0.0
      %927 = vmatpush1.msra.mxu0 %v896
      %928 = vmatprep.subr.mxu0 0.0
      %929 = vmatpush1.msra.mxu0 %v897
      %930 = vmatprep.subr.mxu0 0.0
      %931 = vmatpush1.msra.mxu0 %v898
      %932 = vmatprep.subr.mxu0 0.0
      %933 = vmatpush1.msra.mxu0 %v899
      %934 = vmatprep.subr.mxu0 0.0
      %935 = vmatpush1.msra.mxu0 %v900
      %936 = vmatprep.subr.mxu0 0.0
      %937 = vmatpush1.msra.mxu0 %v901
      %938 = vmatprep.subr.mxu0 0.0
      %939 = vmatpush1.msra.mxu0 %v902
      %940 = vmatprep.subr.mxu0 0.0
      %941 = vmatpush1.msra.mxu0 %v903
      %942 = vmatprep.subr.mxu0 0.0
      %943 = vmatpush1.msra.mxu0 %v904
      %944 = vmatprep.subr.mxu0 0.0
      %945 = vmatpush1.msra.mxu0 0.0
      %946 = vmatprep.subr.mxu0 0.0
      %947 = vmatpush1.msra.mxu0 0.0
      %948 = vmatprep.subr.mxu0 0.0
      %949 = vmatpush1.msra.mxu0 0.0
      %950 = vmatprep.subr.mxu0 0.0
      %951 = vmatpush1.msra.mxu0 0.0
      %952 = vmatprep.subr.mxu0 0.0
      %953 = vmatpush1.msra.mxu0 0.0
      %954 = vmatprep.subr.mxu0 0.0
      %955 = vmatpush1.msra.mxu0 0.0
      %956 = vmatprep.subr.mxu0 0.0
      %957 = vmatpush1.msra.mxu0 0.0
      %958 = vmatprep.subr.mxu0 0.0
      %959 = vmatpush1.msra.mxu0 0.0
      %960 = vmatprep.subr.mxu0 0.0
      %961 = vmatpush1.msra.mxu0 0.0
      %962 = vmatprep.subr.mxu0 0.0
      %963 = vmatpush1.msra.mxu0 0.0
      %964 = vmatprep.subr.mxu0 0.0
      %965 = vmatpush1.msra.mxu0 0.0
      %966 = vmatprep.subr.mxu0 0.0
      %967 = vmatpush1.msra.mxu0 0.0
      %968 = vmatprep.subr.mxu0 0.0
      %969 = vmatpush1.msra.mxu0 0.0
      %970 = vmatprep.subr.mxu0 0.0
      %971 = vmatpush1.msra.mxu0 0.0
      %972 = vmatprep.subr.mxu0 0.0
      %973 = vmatpush1.msra.mxu0 0.0
      %974 = vmatprep.subr.mxu0 0.0
      %975 = vmatpush1.msra.mxu0 0.0
      %976 = vmatprep.mubr.f32.mxu0 0.0
      %977 = vmatmul.mubr.f32.gmra.mrb[0].mxu0 %v888
      %v978 = vpop.f32.mrb[0].mxu0
      %v979 = vadd.f32 %v910, %v978
      %v980 = vpop.f32.mrb[0].mxu0
      %981 = vdwg.mxu0
      %982 = vst [vmem:[#allocation11] sm:$0xff] %v979
    $region53: #{tpu_custom_call.1} parent=1 // pred_fallthru
      _
    // Predicated region
    $region54: #{tpu_custom_call.1} parent=1 // pred_check
      _
    $region55: #{tpu_custom_call.1} parent=1 // pred_check_branch
      %984 = sbr.rel (0) target = $region57
    $region56: #{tpu_custom_call.1} parent=1 // pred_region
      %s986 = ssub.s32 128, 128
      %987 = vsyncadd [#allocation5], %s986
      %s989 = sshll.u32 [#allocation11], 4
      %s990 = int_to_ptr.vmem [resolvable:$true] %s989
      %992 = dma.vmem_to_hbm [thread:$0]  %s990, 128, %s7, [#allocation5]
    $region57: #{tpu_custom_call.1} parent=1 // pred_fallthru
      _
    // Predicated region
    $region58: #{tpu_custom_call.1} parent=1 // pred_check
      _
    $region59: #{tpu_custom_call.1} parent=1 // pred_check_branch
      %994 = sbr.rel (0) target = $region61
    $region60: #{tpu_custom_call.1} parent=1 // pred_region
      %995 = dma.done [#allocation5], 128
    $region61: #{tpu_custom_call.1} parent=1 // pred_fallthru
      _
    %996 = vsyncpa [#allocation4], 1
    %997 = vsyncpa [#allocation7], 1
    %998 = vsyncpa [#allocation10], 1
    %999 = vsyncpa [#allocation5], 1

</llo_original>
